<compile_context>
chip_gen: v6e
topology: v6e:2x2x1
jax: 0.10.0
libtpu: 0.0.40
codegen_flags: <defaults>
</compile_context>

<pallas_src>
import jax
import jax.numpy as jnp
from jax.experimental import pallas as pl
from jax.experimental.pallas import tpu as pltpu

_LANE = 128
_ROW_TILE_CAP = 512


def _round_up(x, m):
    return ((x + m - 1) // m) * m


# ----------------------------------------------------------------------------
# Fused ICM kernel: inverse-MLP trunk + forward-MLP trunk + output head(s).
# ----------------------------------------------------------------------------
def _make_icm_kernel(n_inv_trunk, n_fwd_trunk, combined):
    n_i = 2 * n_inv_trunk
    n_f = 2 * n_fwd_trunk

    def trunk(x, refs):
        h = x
        for p in range(0, len(refs), 2):
            w = refs[p][...]
            b = refs[p + 1][...].astype(jnp.float32)
            h = jnp.dot(h.astype(w.dtype), w,
                        preferred_element_type=jnp.float32) + b
            h = jnp.maximum(h, 0.0)
        return h

    if combined:
        def kernel(inv_in_ref, fwd_in_ref, *refs):
            inv_refs = refs[:n_i]
            fwd_refs = refs[n_i:n_i + n_f]
            hw_inv, hw_fwd, hb, out_ref = refs[n_i + n_f:]
            h_inv = trunk(inv_in_ref[...], inv_refs)
            h_fwd = trunk(fwd_in_ref[...], fwd_refs)
            # Disjoint-column heads accumulate into one lane-dense slab:
            #   cols [0:A]   <- inverse head,  cols [A:A+F] <- forward head.
            out = (jnp.dot(h_inv.astype(hw_inv.dtype), hw_inv[...],
                           preferred_element_type=jnp.float32)
                   + jnp.dot(h_fwd.astype(hw_fwd.dtype), hw_fwd[...],
                             preferred_element_type=jnp.float32)
                   + hb[...].astype(jnp.float32))
            out_ref[...] = out.astype(out_ref.dtype)
        return kernel

    def kernel(inv_in_ref, fwd_in_ref, *refs):
        inv_refs = refs[:n_i]
        fwd_refs = refs[n_i:n_i + n_f]
        hw_inv, hb_inv, hw_fwd, hb_fwd, act_out_ref, feat_out_ref = refs[n_i + n_f:]
        h_inv = trunk(inv_in_ref[...], inv_refs)
        h_fwd = trunk(fwd_in_ref[...], fwd_refs)
        act_out_ref[...] = (jnp.dot(h_inv.astype(hw_inv.dtype), hw_inv[...],
                                    preferred_element_type=jnp.float32)
                            + hb_inv[...].astype(jnp.float32)).astype(act_out_ref.dtype)
        feat_out_ref[...] = (jnp.dot(h_fwd.astype(hw_fwd.dtype), hw_fwd[...],
                                     preferred_element_type=jnp.float32)
                             + hb_fwd[...].astype(jnp.float32)).astype(feat_out_ref.dtype)
    return kernel


# ----------------------------------------------------------------------------
# Parameter construction (mirrors the torch __init__ shapes / init)
# ----------------------------------------------------------------------------
def _orthogonal_linear(key, in_dim, out_dim, gain):
    # torch: nn.init.orthogonal_(weight[out, in], gain); bias = 0
    w_torch = jax.nn.initializers.orthogonal(scale=gain)(
        key, (out_dim, in_dim), jnp.float32)
    w = jnp.transpose(w_torch)                  # store as (in, out): y = x @ W + b
    b = jnp.zeros((1, out_dim), jnp.float32)
    return w, b


def make_icm_params(key, feature_dim, act_dim, hidden_size_inv, hidden_sizes_fwd):
    if not isinstance(hidden_size_inv, (list, tuple)):
        hidden_size_inv = [hidden_size_inv]
    if not isinstance(hidden_sizes_fwd, (list, tuple)):
        hidden_sizes_fwd = [hidden_sizes_fwd]

    gain_h = float(jnp.sqrt(2.0))

    # Inverse model: [2F] + hidden (ReLU after each), then Linear->act_dim (gain 0.01)
    inv_dims = [2 * feature_dim] + list(hidden_size_inv)
    inv_w, inv_b = [], []
    for i in range(len(inv_dims) - 1):
        key, sub = jax.random.split(key)
        w, b = _orthogonal_linear(sub, inv_dims[i], inv_dims[i + 1], gain_h)
        inv_w.append(w); inv_b.append(b)
    key, sub = jax.random.split(key)
    w, b = _orthogonal_linear(sub, inv_dims[-1], act_dim, 0.01)
    inv_w.append(w); inv_b.append(b)

    # Forward model: [F+A] + hidden (ReLU after each), then Linear->F (gain sqrt(2))
    fwd_dims = [feature_dim + act_dim] + list(hidden_sizes_fwd)
    fwd_w, fwd_b = [], []
    for i in range(len(fwd_dims) - 1):
        key, sub = jax.random.split(key)
        w, b = _orthogonal_linear(sub, fwd_dims[i], fwd_dims[i + 1], gain_h)
        fwd_w.append(w); fwd_b.append(b)
    key, sub = jax.random.split(key)
    w, b = _orthogonal_linear(sub, fwd_dims[-1], feature_dim, gain_h)
    fwd_w.append(w); fwd_b.append(b)

    return {"inv_w": inv_w, "inv_b": inv_b, "fwd_w": fwd_w, "fwd_b": fwd_b}


def prepare_icm_params(params, compute_dtype=jnp.bfloat16):
    """One-time param prep: pad every K / output dim to 128-lane alignment,
    split trunk vs head, and (if A+F<=128) fuse the two heads into a single
    lane-dense 128-wide output slab. Weights cast to compute_dtype, biases f32."""
    inv_w, inv_b = params["inv_w"], params["inv_b"]
    fwd_w, fwd_b = params["fwd_w"], params["fwd_b"]
    F = fwd_w[-1].shape[1]                 # forward model outputs feature_dim
    A = inv_w[-1].shape[1]                 # inverse model outputs act_dim
    k_inv = _round_up(inv_w[0].shape[0], _LANE)    # padded 2F
    k_fwd = _round_up(fwd_w[0].shape[0], _LANE)    # padded F+A

    def pad_w(w, rows, cols):
        return jnp.pad(w, ((0, rows - w.shape[0]),
                           (0, cols - w.shape[1]))).astype(compute_dtype)

    def pad_b(b, cols):
        return jnp.pad(b, ((0, 0), (0, cols - b.shape[1]))).astype(jnp.float32)

    def build_trunk(ws, bs, k0):
        flat = []
        in_pad = k0
        for w, b in zip(ws[:-1], bs[:-1]):
            out_pad = _round_up(w.shape[1], _LANE)
            flat += [pad_w(w, in_pad, out_pad), pad_b(b, out_pad)]
            in_pad = out_pad
        return flat, in_pad                 # in_pad = padded K of the output head

    inv_trunk, h_inv_pad = build_trunk(inv_w, inv_b, k_inv)
    fwd_trunk, h_fwd_pad = build_trunk(fwd_w, fwd_b, k_fwd)

    combined = (A + F) <= _LANE
    if combined:
        out_w = _LANE
        hw_inv = jnp.zeros((h_inv_pad, out_w), jnp.float32)
        hw_inv = hw_inv.at[:inv_w[-1].shape[0], :A].set(inv_w[-1]).astype(compute_dtype)
        hw_fwd = jnp.zeros((h_fwd_pad, out_w), jnp.float32)
        hw_fwd = hw_fwd.at[:fwd_w[-1].shape[0], A:A + F].set(fwd_w[-1]).astype(compute_dtype)
        hb = jnp.zeros((1, out_w), jnp.float32)
        hb = hb.at[:, :A].set(inv_b[-1]).at[:, A:A + F].set(fwd_b[-1])
        heads = [hw_inv, hw_fwd, hb]
    else:
        out_a = _round_up(A, _LANE)
        out_f = _round_up(F, _LANE)
        heads = [pad_w(inv_w[-1], h_inv_pad, out_a), pad_b(inv_b[-1], out_a),
                 pad_w(fwd_w[-1], h_fwd_pad, out_f), pad_b(fwd_b[-1], out_f)]

    return {"inv_trunk": inv_trunk, "fwd_trunk": fwd_trunk, "heads": heads,
            "combined": combined, "feature_dim": F, "act_dim": A,
            "k_inv": k_inv, "k_fwd": k_fwd, "compute_dtype": compute_dtype}


# ----------------------------------------------------------------------------
# ICM forward: (act_pred, features_next_pred) via a single fused pallas_call
# ----------------------------------------------------------------------------
def icm_forward(prepared, features, act):
    cd = prepared["compute_dtype"]
    F = prepared["feature_dim"]
    A = prepared["act_dim"]
    combined = prepared["combined"]
    inv_trunk = list(prepared["inv_trunk"])
    fwd_trunk = list(prepared["fwd_trunk"])
    heads = list(prepared["heads"])
    k_inv, k_fwd = prepared["k_inv"], prepared["k_fwd"]

    B, T, Fdim = features.shape
    assert Fdim == F and act.shape[-1] == A
    N_fwd = B * T
    N_inv = B * (T - 1)

    # 16-aligned row tile (bf16 sublane packing), up to 512 rows/step; keep the
    # grid >=2 steps when possible so v7x's two TensorCores are both used.
    rows_a = _round_up(N_fwd, 16)
    tile_n = min(_ROW_TILE_CAP, rows_a)
    if rows_a > 16:
        tile_n = min(tile_n, _round_up((rows_a + 1) // 2, 16))
    n_pad = _round_up(N_fwd, tile_n)
    grid = (n_pad // tile_n,)

    # Pre-concatenate + cast + pad the two input slabs (one cheap XLA pass over
    # tiny data; acceptable even for largish F — see review note).
    inv_in = jnp.concatenate([features[:, :-1], features[:, 1:]],
                             axis=-1).reshape(N_inv, 2 * F).astype(cd)
    fwd_in = jnp.concatenate([features, act],
                             axis=-1).reshape(N_fwd, F + A).astype(cd)

    def pad2d(x, rows, cols):
        return jnp.pad(x, ((0, rows - x.shape[0]), (0, cols - x.shape[1])))

    inv_in = pad2d(inv_in, n_pad, k_inv)
    fwd_in = pad2d(fwd_in, n_pad, k_fwd)

    params_flat = inv_trunk + fwd_trunk + heads
    data_specs = [pl.BlockSpec((tile_n, k_inv), lambda i: (i, 0)),
                  pl.BlockSpec((tile_n, k_fwd), lambda i: (i, 0))]
    param_specs = [pl.BlockSpec(p.shape, lambda i: (0, 0)) for p in params_flat]

    out_dtype = cd
    if combined:
        out_w = heads[-1].shape[-1]
        out_shape = jax.ShapeDtypeStruct((n_pad, out_w), out_dtype)
        out_specs = pl.BlockSpec((tile_n, out_w), lambda i: (i, 0))
        out_block_elems = tile_n * out_w
    else:
        out_a = heads[0].shape[-1]
        out_f = heads[2].shape[-1]
        out_shape = (jax.ShapeDtypeStruct((n_pad, out_a), out_dtype),
                     jax.ShapeDtypeStruct((n_pad, out_f), out_dtype))
        out_specs = (pl.BlockSpec((tile_n, out_a), lambda i: (i, 0)),
                     pl.BlockSpec((tile_n, out_f), lambda i: (i, 0)))
        out_block_elems = tile_n * (out_a + out_f)

    # VMEM budget: 2x (double-buffered) blocks + weights + headroom, capped to
    # v7x's 64 MiB physical VMEM.
    itm = jnp.dtype(cd).itemsize
    block_bytes = (tile_n * (k_inv + k_fwd) + out_block_elems) * itm
    block_bytes += sum(int(p.size) * p.dtype.itemsize for p in params_flat)
    vmem_limit = int(min(64 << 20, max(2 * block_bytes + (4 << 20), 16 << 20)))

    kernel = _make_icm_kernel(len(inv_trunk) // 2, len(fwd_trunk) // 2, combined)
    outs = pl.pallas_call(
        kernel,
        out_shape=out_shape,
        grid=grid,
        in_specs=data_specs + param_specs,
        out_specs=out_specs,
        compiler_params=pltpu.CompilerParams(
            dimension_semantics=("parallel",),
            vmem_limit_bytes=vmem_limit),
    )(inv_in, fwd_in, *params_flat)

    if combined:
        act_pred = outs[:N_inv, :A].astype(jnp.float32).reshape(B, T - 1, A)
        feat_pred = outs[:N_fwd, A:A + F].astype(jnp.float32).reshape(B, T, F)
    else:
        act_out, feat_out = outs
        act_pred = act_out[:N_inv, :A].astype(jnp.float32).reshape(B, T - 1, A)
        feat_pred = feat_out[:N_fwd, :F].astype(jnp.float32).reshape(B, T, F)
    return act_pred, feat_pred


# ----------------------------------------------------------------------------
# Self-test
# ----------------------------------------------------------------------------
if __name__ == "__main__":
    # Pure-JAX reference with torch semantics (x @ W + b, ReLU between layers).
    def mlp_ref(x, ws, bs, cd=jnp.float32):
        h = x
        for i, (w, b) in enumerate(zip(ws, bs)):
            h = jnp.dot(h.astype(cd), w.astype(cd),
                        preferred_element_type=jnp.float32) + b.astype(jnp.float32)
            if i < len(ws) - 1:
                h = jnp.maximum(h, 0.0)
        return h

    def icm_ref(raw, features, act, cd=jnp.float32):
        B, T, F = features.shape
        A = act.shape[-1]
        inv_in = jnp.concatenate([features[:, :-1], features[:, 1:]],
                                 axis=-1).reshape(-1, 2 * F)
        fwd_in = jnp.concatenate([features, act], axis=-1).reshape(-1, F + A)
        ap = mlp_ref(inv_in, raw["inv_w"], raw["inv_b"], cd).reshape(B, T - 1, A)
        fp = mlp_ref(fwd_in, raw["fwd_w"], raw["fwd_b"], cd).reshape(B, T, F)
        return ap, fp

    # ---- small shapes consistent with the module ----
    B, T = 2, 8
    feature_dim, act_dim = 32, 4
    hidden_size_inv = 32            # int (module handles int -> [int])
    hidden_sizes_fwd = [32, 32]

    key = jax.random.PRNGKey(0)
    key, k_feat, k_act, k_par = jax.random.split(key, 4)
    features = jax.random.normal(k_feat, (B, T, feature_dim), jnp.float32)
    act = jax.random.normal(k_act, (B, T, act_dim), jnp.float32)

    raw = make_icm_params(k_par, feature_dim, act_dim,
                          hidden_size_inv, hidden_sizes_fwd)

    # f32 path (tight check against torch-equivalent math)
    params_f32 = prepare_icm_params(raw, jnp.float32)
    run_f32 = jax.jit(lambda f, a: icm_forward(params_f32, f, a))
    ap32, fp32 = run_f32(features, act)

    # bf16-operand / f32-accumulate path (default; MXU-friendly)
    params_bf16 = prepare_icm_params(raw, jnp.bfloat16)
    run_bf16 = jax.jit(lambda f, a: icm_forward(params_bf16, f, a))
    apbf, fpbf = run_bf16(features, act)
    jax.block_until_ready((ap32, fp32, apbf, fpbf))

    assert ap32.shape == (B, T - 1, act_dim)
    assert fp32.shape == (B, T, feature_dim)
    assert apbf.shape == (B, T - 1, act_dim)
    assert fpbf.shape == (B, T, feature_dim)

    ref_act, ref_feat = icm_ref(raw, features, act, jnp.float32)
    assert jnp.allclose(ap32, ref_act, atol=1e-4, rtol=1e-4)
    assert jnp.allclose(fp32, ref_feat, atol=1e-4, rtol=1e-4)

    ref_act_bf, ref_feat_bf = icm_ref(raw, features, act, jnp.bfloat16)
    assert jnp.allclose(apbf, ref_act_bf, atol=2e-2, rtol=2e-2)
    assert jnp.allclose(fpbf, ref_feat_bf, atol=2e-2, rtol=2e-2)

    # ---- larger shape: multi-step grid (>=2 tiles) + row padding ----
    B2, T2 = 8, 33
    kf2, ka2 = jax.random.split(jax.random.PRNGKey(1))
    features2 = jax.random.normal(kf2, (B2, T2, feature_dim), jnp.float32)
    act2 = jax.random.normal(ka2, (B2, T2, act_dim), jnp.float32)
    ap2, fp2 = icm_forward(params_f32, features2, act2)
    jax.block_until_ready((ap2, fp2))
    ref_act2, ref_feat2 = icm_ref(raw, features2, act2, jnp.float32)
    assert jnp.allclose(ap2, ref_act2, atol=1e-4, rtol=1e-4)
    assert jnp.allclose(fp2, ref_feat2, atol=1e-4, rtol=1e-4)

    # ---- separate-output-head path (act_dim + feature_dim > 128) ----
    F3, A3 = 160, 8
    raw3 = make_icm_params(jax.random.PRNGKey(2), F3, A3, 64, [64])
    params3 = prepare_icm_params(raw3, jnp.float32)
    kf3, ka3 = jax.random.split(jax.random.PRNGKey(3))
    features3 = jax.random.normal(kf3, (2, 5, F3), jnp.float32)
    act3 = jax.random.normal(ka3, (2, 5, A3), jnp.float32)
    ap3, fp3 = icm_forward(params3, features3, act3)
    jax.block_until_ready((ap3, fp3))
    ref_act3, ref_feat3 = icm_ref(raw3, features3, act3, jnp.float32)
    assert jnp.allclose(ap3, ref_act3, atol=1e-4, rtol=1e-4)
    assert jnp.allclose(fp3, ref_feat3, atol=1e-4, rtol=1e-4)

    print("KERNEL_OK")
</pallas_src>

<mosaic_0001>
module attributes {stable_mosaic.version = 11 : i64} {
  func.func @kernel(%arg0: i32, %arg1: memref<16x128xf32, #tpu.memory_space<vmem>>, %arg2: memref<16x128xf32, #tpu.memory_space<vmem>>, %arg3: memref<128x128xf32, #tpu.memory_space<vmem>>, %arg4: memref<1x128xf32, #tpu.memory_space<vmem>>, %arg5: memref<128x128xf32, #tpu.memory_space<vmem>>, %arg6: memref<1x128xf32, #tpu.memory_space<vmem>>, %arg7: memref<128x128xf32, #tpu.memory_space<vmem>>, %arg8: memref<1x128xf32, #tpu.memory_space<vmem>>, %arg9: memref<128x128xf32, #tpu.memory_space<vmem>>, %arg10: memref<128x128xf32, #tpu.memory_space<vmem>>, %arg11: memref<1x128xf32, #tpu.memory_space<vmem>>, %arg12: memref<16x128xf32, #tpu.memory_space<vmem>>) attributes {dimension_semantics = [#tpu.dimension_semantics<parallel>], iteration_bounds = array<i64: 1>, scalar_prefetch = 0 : i64, scratch_operands = 0 : i64, tpu.core_type = #tpu.core_type<tc>, window_params = [{transform_indices = @transform_0, window_bounds = array<i64: 16, 128>}, {transform_indices = @transform_1, window_bounds = array<i64: 16, 128>}, {pipeline_mode = #tpu.pipeline_mode<synchronous>, transform_indices = @transform_2, window_bounds = array<i64: 128, 128>}, {pipeline_mode = #tpu.pipeline_mode<synchronous>, transform_indices = @transform_3, window_bounds = array<i64: 1, 128>}, {pipeline_mode = #tpu.pipeline_mode<synchronous>, transform_indices = @transform_4, window_bounds = array<i64: 128, 128>}, {pipeline_mode = #tpu.pipeline_mode<synchronous>, transform_indices = @transform_5, window_bounds = array<i64: 1, 128>}, {pipeline_mode = #tpu.pipeline_mode<synchronous>, transform_indices = @transform_6, window_bounds = array<i64: 128, 128>}, {pipeline_mode = #tpu.pipeline_mode<synchronous>, transform_indices = @transform_7, window_bounds = array<i64: 1, 128>}, {pipeline_mode = #tpu.pipeline_mode<synchronous>, transform_indices = @transform_8, window_bounds = array<i64: 128, 128>}, {pipeline_mode = #tpu.pipeline_mode<synchronous>, transform_indices = @transform_9, window_bounds = array<i64: 128, 128>}, {pipeline_mode = #tpu.pipeline_mode<synchronous>, transform_indices = @transform_10, window_bounds = array<i64: 1, 128>}, {transform_indices = @transform_11, window_bounds = array<i64: 16, 128>}]} {
    %c0 = arith.constant 0 : index
    %c0_0 = arith.constant 0 : index
    %0 = vector.load %arg1[%c0, %c0_0] : memref<16x128xf32, #tpu.memory_space<vmem>>, vector<16x128xf32>
    %c0_1 = arith.constant 0 : index
    %c0_2 = arith.constant 0 : index
    %1 = vector.load %arg3[%c0_1, %c0_2] : memref<128x128xf32, #tpu.memory_space<vmem>>, vector<128x128xf32>
    %c0_3 = arith.constant 0 : index
    %c0_4 = arith.constant 0 : index
    %2 = vector.load %arg4[%c0_3, %c0_4] : memref<1x128xf32, #tpu.memory_space<vmem>>, vector<1x128xf32>
    %cst = arith.constant dense<0.000000e+00> : vector<16x128xf32>
    %3 = tpu.matmul %0, %1, %cst {dimension_numbers = #tpu.dot_dimension_numbers<[1], [0], [0], [1], [0, 0, 1, 1], [], []>} : vector<16x128xf32>, vector<128x128xf32>, vector<16x128xf32> -> vector<16x128xf32>
    %4 = vector.broadcast %2 : vector<1x128xf32> to vector<16x128xf32>
    %5 = arith.addf %3, %4 : vector<16x128xf32>
    %cst_5 = arith.constant 0.000000e+00 : f32
    %6 = vector.broadcast %cst_5 : f32 to vector<16x128xf32>
    %7 = arith.maximumf %5, %6 : vector<16x128xf32>
    %c0_6 = arith.constant 0 : index
    %c0_7 = arith.constant 0 : index
    %8 = vector.load %arg2[%c0_6, %c0_7] : memref<16x128xf32, #tpu.memory_space<vmem>>, vector<16x128xf32>
    %c0_8 = arith.constant 0 : index
    %c0_9 = arith.constant 0 : index
    %9 = vector.load %arg5[%c0_8, %c0_9] : memref<128x128xf32, #tpu.memory_space<vmem>>, vector<128x128xf32>
    %c0_10 = arith.constant 0 : index
    %c0_11 = arith.constant 0 : index
    %10 = vector.load %arg6[%c0_10, %c0_11] : memref<1x128xf32, #tpu.memory_space<vmem>>, vector<1x128xf32>
    %cst_12 = arith.constant dense<0.000000e+00> : vector<16x128xf32>
    %11 = tpu.matmul %8, %9, %cst_12 {dimension_numbers = #tpu.dot_dimension_numbers<[1], [0], [0], [1], [0, 0, 1, 1], [], []>} : vector<16x128xf32>, vector<128x128xf32>, vector<16x128xf32> -> vector<16x128xf32>
    %12 = vector.broadcast %10 : vector<1x128xf32> to vector<16x128xf32>
    %13 = arith.addf %11, %12 : vector<16x128xf32>
    %cst_13 = arith.constant 0.000000e+00 : f32
    %14 = vector.broadcast %cst_13 : f32 to vector<16x128xf32>
    %15 = arith.maximumf %13, %14 : vector<16x128xf32>
    %c0_14 = arith.constant 0 : index
    %c0_15 = arith.constant 0 : index
    %16 = vector.load %arg7[%c0_14, %c0_15] : memref<128x128xf32, #tpu.memory_space<vmem>>, vector<128x128xf32>
    %c0_16 = arith.constant 0 : index
    %c0_17 = arith.constant 0 : index
    %17 = vector.load %arg8[%c0_16, %c0_17] : memref<1x128xf32, #tpu.memory_space<vmem>>, vector<1x128xf32>
    %cst_18 = arith.constant dense<0.000000e+00> : vector<16x128xf32>
    %18 = tpu.matmul %15, %16, %cst_18 {dimension_numbers = #tpu.dot_dimension_numbers<[1], [0], [0], [1], [0, 0, 1, 1], [], []>} : vector<16x128xf32>, vector<128x128xf32>, vector<16x128xf32> -> vector<16x128xf32>
    %19 = vector.broadcast %17 : vector<1x128xf32> to vector<16x128xf32>
    %20 = arith.addf %18, %19 : vector<16x128xf32>
    %cst_19 = arith.constant 0.000000e+00 : f32
    %21 = vector.broadcast %cst_19 : f32 to vector<16x128xf32>
    %22 = arith.maximumf %20, %21 : vector<16x128xf32>
    %c0_20 = arith.constant 0 : index
    %c0_21 = arith.constant 0 : index
    %23 = vector.load %arg9[%c0_20, %c0_21] : memref<128x128xf32, #tpu.memory_space<vmem>>, vector<128x128xf32>
    %cst_22 = arith.constant dense<0.000000e+00> : vector<16x128xf32>
    %24 = tpu.matmul %7, %23, %cst_22 {dimension_numbers = #tpu.dot_dimension_numbers<[1], [0], [0], [1], [0, 0, 1, 1], [], []>} : vector<16x128xf32>, vector<128x128xf32>, vector<16x128xf32> -> vector<16x128xf32>
    %c0_23 = arith.constant 0 : index
    %c0_24 = arith.constant 0 : index
    %25 = vector.load %arg10[%c0_23, %c0_24] : memref<128x128xf32, #tpu.memory_space<vmem>>, vector<128x128xf32>
    %cst_25 = arith.constant dense<0.000000e+00> : vector<16x128xf32>
    %26 = tpu.matmul %22, %25, %cst_25 {dimension_numbers = #tpu.dot_dimension_numbers<[1], [0], [0], [1], [0, 0, 1, 1], [], []>} : vector<16x128xf32>, vector<128x128xf32>, vector<16x128xf32> -> vector<16x128xf32>
    %27 = arith.addf %24, %26 : vector<16x128xf32>
    %c0_26 = arith.constant 0 : index
    %c0_27 = arith.constant 0 : index
    %28 = vector.load %arg11[%c0_26, %c0_27] : memref<1x128xf32, #tpu.memory_space<vmem>>, vector<1x128xf32>
    %29 = vector.broadcast %28 : vector<1x128xf32> to vector<16x128xf32>
    %30 = arith.addf %27, %29 : vector<16x128xf32>
    %c0_28 = arith.constant 0 : index
    %c0_29 = arith.constant 0 : index
    %31 = vector.load %arg12[%c0_28, %c0_29] : memref<16x128xf32, #tpu.memory_space<vmem>>, vector<16x128xf32>
    tpu.vector_store %arg12[%c0_28, %c0_29], %30 {strides = array<i32>} : memref<16x128xf32, #tpu.memory_space<vmem>>, vector<16x128xf32>,
    return
  }
  func.func @transform_0(%arg0: i32) -> (i32, i32) {
    %c0_i32 = arith.constant 0 : i32
    %c0_i32_0 = arith.constant 0 : i32
    return %arg0, %c0_i32 : i32, i32
  }
  func.func @transform_1(%arg0: i32) -> (i32, i32) {
    %c0_i32 = arith.constant 0 : i32
    %c0_i32_0 = arith.constant 0 : i32
    return %arg0, %c0_i32 : i32, i32
  }
  func.func @transform_2(%arg0: i32) -> (i32, i32) {
    %c0_i32 = arith.constant 0 : i32
    %c0_i32_0 = arith.constant 0 : i32
    %c0_i32_1 = arith.constant 0 : i32
    return %c0_i32, %c0_i32_0 : i32, i32
  }
  func.func @transform_3(%arg0: i32) -> (i32, i32) {
    %c0_i32 = arith.constant 0 : i32
    %c0_i32_0 = arith.constant 0 : i32
    %c0_i32_1 = arith.constant 0 : i32
    return %c0_i32, %c0_i32_0 : i32, i32
  }
  func.func @transform_4(%arg0: i32) -> (i32, i32) {
    %c0_i32 = arith.constant 0 : i32
    %c0_i32_0 = arith.constant 0 : i32
    %c0_i32_1 = arith.constant 0 : i32
    return %c0_i32, %c0_i32_0 : i32, i32
  }
  func.func @transform_5(%arg0: i32) -> (i32, i32) {
    %c0_i32 = arith.constant 0 : i32
    %c0_i32_0 = arith.constant 0 : i32
    %c0_i32_1 = arith.constant 0 : i32
    return %c0_i32, %c0_i32_0 : i32, i32
  }
  func.func @transform_6(%arg0: i32) -> (i32, i32) {
    %c0_i32 = arith.constant 0 : i32
    %c0_i32_0 = arith.constant 0 : i32
    %c0_i32_1 = arith.constant 0 : i32
    return %c0_i32, %c0_i32_0 : i32, i32
  }
  func.func @transform_7(%arg0: i32) -> (i32, i32) {
    %c0_i32 = arith.constant 0 : i32
    %c0_i32_0 = arith.constant 0 : i32
    %c0_i32_1 = arith.constant 0 : i32
    return %c0_i32, %c0_i32_0 : i32, i32
  }
  func.func @transform_8(%arg0: i32) -> (i32, i32) {
    %c0_i32 = arith.constant 0 : i32
    %c0_i32_0 = arith.constant 0 : i32
    %c0_i32_1 = arith.constant 0 : i32
    return %c0_i32, %c0_i32_0 : i32, i32
  }
  func.func @transform_9(%arg0: i32) -> (i32, i32) {
    %c0_i32 = arith.constant 0 : i32
    %c0_i32_0 = arith.constant 0 : i32
    %c0_i32_1 = arith.constant 0 : i32
    return %c0_i32, %c0_i32_0 : i32, i32
  }
  func.func @transform_10(%arg0: i32) -> (i32, i32) {
    %c0_i32 = arith.constant 0 : i32
    %c0_i32_0 = arith.constant 0 : i32
    %c0_i32_1 = arith.constant 0 : i32
    return %c0_i32, %c0_i32_0 : i32, i32
  }
  func.func @transform_11(%arg0: i32) -> (i32, i32) {
    %c0_i32 = arith.constant 0 : i32
    %c0_i32_0 = arith.constant 0 : i32
    return %arg0, %c0_i32 : i32, i32
  }
}

</mosaic_0001>

<llo_original>
// kernel: _lambda_.1
$region0: #{_lambda_.1}
  #allocation0 [shape = 'u32[]', space=smem, size = 0x4, offset = 0x4, fixed_abs, tag = 'smem constant byte address 0x4 - core index']
  #allocation1 [shape = 'u32[144,128]{1,0:T(1,128)}', space=vmem, size = 0x12000, scoped, tag = 'internal scratch']
  %s0 = inlined_call_operand.vmem [shape: f32[16,128], index: 0, kind: input, shape index: {}]
  %s1 = inlined_call_operand.vmem [shape: f32[16,128], index: 1, kind: input, shape index: {}]
  %s2 = inlined_call_operand.hbm [shape: f32[128,128], index: 2, kind: input, shape index: {}]
  %s3 = inlined_call_operand.vmem [shape: f32[1,128], index: 3, kind: input, shape index: {}, may-alias: {3,5,7,10}]
  %s4 = inlined_call_operand.vmem [shape: f32[128,128], index: 4, kind: input, shape index: {}]
  %s5 = inlined_call_operand.vmem [shape: f32[1,128], index: 5, kind: input, shape index: {}, may-alias: {3,5,7,10}]
  %s6 = inlined_call_operand.hbm [shape: f32[128,128], index: 6, kind: input, shape index: {}]
  %s7 = inlined_call_operand.vmem [shape: f32[1,128], index: 7, kind: input, shape index: {}, may-alias: {3,5,7,10}]
  %s8 = inlined_call_operand.hbm [shape: f32[128,128], index: 8, kind: input, shape index: {}]
  %s9 = inlined_call_operand.hbm [shape: f32[128,128], index: 9, kind: input, shape index: {}]
  %s10 = inlined_call_operand.vmem [shape: f32[1,128], index: 10, kind: input, shape index: {}, may-alias: {3,5,7,10}]
  %s11 = inlined_call_operand.vmem [shape: f32[16,128], index: 11, kind: output, shape index: {}]
  %s12 = sld [smem:[#allocation0]]
  $region70: #{_lambda_.1} parent=0
    _
  %s14 = ssub.s32 1, %s12
  %s15 = scalar_select 0, %s14, %s12
  $region1: #{_lambda_.1} parent=0
    #allocation2 [shape = 'u8[65536]{0}', space=vmem, size = 0x10000, scoped, tag = 'input window, operand 2, single buffered']
    #allocation3 [shape = 's32[1]{0}', space=sflag, size = 0x4, scoped, tag = 'scoped memory for _lambda_.1']
    #allocation4 [shape = 'u8[65536]{0}', space=vmem, size = 0x10000, scoped, tag = 'input window, operand 6, single buffered']
    #allocation5 [shape = 's32[1]{0}', space=sflag, size = 0x4, scoped, tag = 'scoped memory for _lambda_.1']
    #allocation6 [shape = 'u8[65536]{0}', space=vmem, size = 0x10000, scoped, tag = 'input window, operand 8, single buffered']
    #allocation7 [shape = 'u8[65536]{0}', space=vmem, size = 0x10000, scoped, tag = 'input window, operand 9, single buffered']
    #allocation8 [shape = 's32[1]{0}', space=sflag, size = 0x4, scoped, tag = 'scoped memory for _lambda_.1']
    %16 = vsyncpa [#allocation3], 0
    %17 = vsyncpa [#allocation5], 0
    %18 = vsyncpa [#allocation8], 0
    // Predicated region
    $region2: #{_lambda_.1} parent=1 // pred_check
      _
    $region3: #{_lambda_.1} parent=1 // pred_check_branch
      %20 = sbr.rel (0) target = $region5
    $region4: #{_lambda_.1} parent=1 // pred_region
      _
    $region5: #{_lambda_.1} parent=1 // pred_fallthru
      _
    // Predicated region
    $region6: #{_lambda_.1} parent=1 // pred_check
      _
    $region7: #{_lambda_.1} parent=1 // pred_check_branch
      %22 = sbr.rel (0) target = $region9
    $region8: #{_lambda_.1} parent=1 // pred_region
      _
    $region9: #{_lambda_.1} parent=1 // pred_fallthru
      _
    // Predicated region
    $region10: #{_lambda_.1} parent=1 // pred_check
      _
    $region11: #{_lambda_.1} parent=1 // pred_check_branch
      %24 = sbr.rel (0) target = $region13
    $region12: #{_lambda_.1} parent=1 // pred_region
      %s26 = ssub.s32 2048, 2048
      %27 = vsyncadd [#allocation3], %s26
      %s28 = sshll.u32 [#allocation2], 4
      %s29 = int_to_ptr.vmem [resolvable:$true] %s28
      %34 = dma.hbm_to_vmem [thread:$0]  %s2, 2048, %s29, [#allocation3], 128, 128, 8
    $region13: #{_lambda_.1} parent=1 // pred_fallthru
      _
    // Predicated region
    $region14: #{_lambda_.1} parent=1 // pred_check
      _
    $region15: #{_lambda_.1} parent=1 // pred_check_branch
      %36 = sbr.rel (0) target = $region17
    $region16: #{_lambda_.1} parent=1 // pred_region
      _
    $region17: #{_lambda_.1} parent=1 // pred_fallthru
      _
    // Predicated region
    $region18: #{_lambda_.1} parent=1 // pred_check
      _
    $region19: #{_lambda_.1} parent=1 // pred_check_branch
      %38 = sbr.rel (0) target = $region21
    $region20: #{_lambda_.1} parent=1 // pred_region
      _
    $region21: #{_lambda_.1} parent=1 // pred_fallthru
      _
    // Predicated region
    $region22: #{_lambda_.1} parent=1 // pred_check
      _
    $region23: #{_lambda_.1} parent=1 // pred_check_branch
      %40 = sbr.rel (0) target = $region25
    $region24: #{_lambda_.1} parent=1 // pred_region
      _
    $region25: #{_lambda_.1} parent=1 // pred_fallthru
      _
    // Predicated region
    $region26: #{_lambda_.1} parent=1 // pred_check
      _
    $region27: #{_lambda_.1} parent=1 // pred_check_branch
      %42 = sbr.rel (0) target = $region29
    $region28: #{_lambda_.1} parent=1 // pred_region
      %s44 = ssub.s32 2048, 2048
      %45 = vsyncadd [#allocation5], %s44
      %s46 = sshll.u32 [#allocation4], 4
      %s47 = int_to_ptr.vmem [resolvable:$true] %s46
      %52 = dma.hbm_to_vmem [thread:$0]  %s6, 2048, %s47, [#allocation5], 128, 128, 8
    $region29: #{_lambda_.1} parent=1 // pred_fallthru
      _
    // Predicated region
    $region30: #{_lambda_.1} parent=1 // pred_check
      _
    $region31: #{_lambda_.1} parent=1 // pred_check_branch
      %54 = sbr.rel (0) target = $region33
    $region32: #{_lambda_.1} parent=1 // pred_region
      _
    $region33: #{_lambda_.1} parent=1 // pred_fallthru
      _
    // Predicated region
    $region34: #{_lambda_.1} parent=1 // pred_check
      _
    $region35: #{_lambda_.1} parent=1 // pred_check_branch
      %56 = sbr.rel (0) target = $region37
    $region36: #{_lambda_.1} parent=1 // pred_region
      %s58 = ssub.s32 2048, 2048
      %59 = vsyncadd [#allocation5], %s58
      %s60 = sshll.u32 [#allocation6], 4
      %s61 = int_to_ptr.vmem [resolvable:$true] %s60
      %66 = dma.hbm_to_vmem [thread:$0]  %s8, 2048, %s61, [#allocation5], 128, 128, 8
    $region37: #{_lambda_.1} parent=1 // pred_fallthru
      _
    // Predicated region
    $region38: #{_lambda_.1} parent=1 // pred_check
      _
    $region39: #{_lambda_.1} parent=1 // pred_check_branch
      %68 = sbr.rel (0) target = $region41
    $region40: #{_lambda_.1} parent=1 // pred_region
      %s70 = ssub.s32 2048, 2048
      %71 = vsyncadd [#allocation8], %s70
      %s72 = sshll.u32 [#allocation7], 4
      %s73 = int_to_ptr.vmem [resolvable:$true] %s72
      %78 = dma.hbm_to_vmem [thread:$0]  %s9, 2048, %s73, [#allocation8], 128, 128, 8
    $region41: #{_lambda_.1} parent=1 // pred_fallthru
      _
    // Predicated region
    $region42: #{_lambda_.1} parent=1 // pred_check
      _
    $region43: #{_lambda_.1} parent=1 // pred_check_branch
      %80 = sbr.rel (0) target = $region45
    $region44: #{_lambda_.1} parent=1 // pred_region
      _
    $region45: #{_lambda_.1} parent=1 // pred_fallthru
      _
    // Predicated region
    $region46: #{_lambda_.1} parent=1 // pred_check
      _
    $region47: #{_lambda_.1} parent=1 // pred_check_branch
      %82 = sbr.rel (0) target = $region49
    $region48: #{_lambda_.1} parent=1 // pred_region
      %83 = dma.done [#allocation3], 2048
    $region49: #{_lambda_.1} parent=1 // pred_fallthru
      _
    // Predicated region
    $region50: #{_lambda_.1} parent=1 // pred_check
      _
    $region51: #{_lambda_.1} parent=1 // pred_check_branch
      %85 = sbr.rel (0) target = $region53
    $region52: #{_lambda_.1} parent=1 // pred_region
      %86 = dma.done [#allocation5], 2048
    $region53: #{_lambda_.1} parent=1 // pred_fallthru
      _
    // Predicated region
    $region54: #{_lambda_.1} parent=1 // pred_check
      _
    $region55: #{_lambda_.1} parent=1 // pred_check_branch
      %88 = sbr.rel (0) target = $region57
    $region56: #{_lambda_.1} parent=1 // pred_region
      %89 = dma.done [#allocation5], 2048
    $region57: #{_lambda_.1} parent=1 // pred_fallthru
      _
    // Predicated region
    $region58: #{_lambda_.1} parent=1 // pred_check
      _
    $region59: #{_lambda_.1} parent=1 // pred_check_branch
      %91 = sbr.rel (0) target = $region61
    $region60: #{_lambda_.1} parent=1 // pred_region
      %92 = dma.done [#allocation8], 2048
    $region61: #{_lambda_.1} parent=1 // pred_fallthru
      _
    %v93 = vld [vmem:[%s0] sm:$0xff]
    %v94 = vld [vmem:[%s0 + $0x8] sm:$0xff]
    %v95 = vld [vmem:[#allocation2] sm:$0xff]
    %v96 = vld [vmem:[#allocation2 + $0x8] sm:$0xff]
    %v97 = vld [vmem:[#allocation2 + $0x10] sm:$0xff]
    %v98 = vld [vmem:[#allocation2 + $0x18] sm:$0xff]
    %v99 = vld [vmem:[#allocation2 + $0x20] sm:$0xff]
    %v100 = vld [vmem:[#allocation2 + $0x28] sm:$0xff]
    %v101 = vld [vmem:[#allocation2 + $0x30] sm:$0xff]
    %v102 = vld [vmem:[#allocation2 + $0x38] sm:$0xff]
    %v103 = vld [vmem:[#allocation2 + $0x40] sm:$0xff]
    %v104 = vld [vmem:[#allocation2 + $0x48] sm:$0xff]
    %v105 = vld [vmem:[#allocation2 + $0x50] sm:$0xff]
    %v106 = vld [vmem:[#allocation2 + $0x58] sm:$0xff]
    %v107 = vld [vmem:[#allocation2 + $0x60] sm:$0xff]
    %v108 = vld [vmem:[#allocation2 + $0x68] sm:$0xff]
    %v109 = vld [vmem:[#allocation2 + $0x70] sm:$0xff]
    %v110 = vld [vmem:[#allocation2 + $0x78] sm:$0xff]
    %v111 = vld [vmem:[%s3] sm:$0x1]
    %v113 = vlaneseq
    %v114 = vshrl.u32 %v113, 7
    %v115 = vsub.s32 0, %v114
    %v116 = vrot.slane %v111, %v115
    %118 = vmatprep.subr.mxu0 0.0
    %119 = vmatpush1.msra.mxu0 %v110
    %120 = vmatprep.subr.mxu0 0.0
    %121 = vmatpush1.msra.mxu0 %v109
    %122 = vmatprep.subr.mxu0 0.0
    %123 = vmatpush1.msra.mxu0 %v108
    %124 = vmatprep.subr.mxu0 0.0
    %125 = vmatpush1.msra.mxu0 %v107
    %126 = vmatprep.subr.mxu0 0.0
    %127 = vmatpush1.msra.mxu0 %v106
    %128 = vmatprep.subr.mxu0 0.0
    %129 = vmatpush1.msra.mxu0 %v105
    %130 = vmatprep.subr.mxu0 0.0
    %131 = vmatpush1.msra.mxu0 %v104
    %132 = vmatprep.subr.mxu0 0.0
    %133 = vmatpush1.msra.mxu0 %v103
    %134 = vmatprep.subr.mxu0 0.0
    %135 = vmatpush1.msra.mxu0 %v102
    %136 = vmatprep.subr.mxu0 0.0
    %137 = vmatpush1.msra.mxu0 %v101
    %138 = vmatprep.subr.mxu0 0.0
    %139 = vmatpush1.msra.mxu0 %v100
    %140 = vmatprep.subr.mxu0 0.0
    %141 = vmatpush1.msra.mxu0 %v99
    %142 = vmatprep.subr.mxu0 0.0
    %143 = vmatpush1.msra.mxu0 %v98
    %144 = vmatprep.subr.mxu0 0.0
    %145 = vmatpush1.msra.mxu0 %v97
    %146 = vmatprep.subr.mxu0 0.0
    %147 = vmatpush1.msra.mxu0 %v96
    %148 = vmatprep.subr.mxu0 0.0
    %149 = vmatpush1.msra.mxu0 %v95
    %150 = vmatprep.subr.mxu0 0.0
    %151 = vmatpush2.msra.mxu0 0.0
    %152 = vmatprep.subr.mxu0 0.0
    %153 = vmatpush2.msra.mxu0 0.0
    %154 = vmatprep.subr.mxu0 0.0
    %155 = vmatpush2.msra.mxu0 0.0
    %156 = vmatprep.subr.mxu0 0.0
    %157 = vmatpush2.msra.mxu0 0.0
    %158 = vmatprep.subr.mxu0 0.0
    %159 = vmatpush2.msra.mxu0 0.0
    %160 = vmatprep.subr.mxu0 0.0
    %161 = vmatpush2.msra.mxu0 0.0
    %162 = vmatprep.subr.mxu0 0.0
    %163 = vmatpush2.msra.mxu0 0.0
    %164 = vmatprep.subr.mxu0 0.0
    %165 = vmatpush2.msra.mxu0 0.0
    %166 = vmatprep.subr.mxu0 0.0
    %167 = vmatpush2.msra.mxu0 0.0
    %168 = vmatprep.subr.mxu0 0.0
    %169 = vmatpush2.msra.mxu0 0.0
    %170 = vmatprep.subr.mxu0 0.0
    %171 = vmatpush2.msra.mxu0 0.0
    %172 = vmatprep.subr.mxu0 0.0
    %173 = vmatpush2.msra.mxu0 0.0
    %174 = vmatprep.subr.mxu0 0.0
    %175 = vmatpush2.msra.mxu0 0.0
    %176 = vmatprep.subr.mxu0 0.0
    %177 = vmatpush2.msra.mxu0 0.0
    %178 = vmatprep.subr.mxu0 0.0
    %179 = vmatpush2.msra.mxu0 0.0
    %180 = vmatprep.subr.mxu0 0.0
    %181 = vmatpush2.msra.mxu0 0.0
    %182 = vmatprep.mubr.f32.mxu0 0.0
    %183 = vmatmul.mubr.f32.gmra.mxu0 %v93
    %v184 = vpop.f32.mrf.mxu0
    %v185 = vadd.f32 %v116, %v184
    %v186 = vpop.f32.mrf.mxu0
    %187 = vmatprep.mubr.f32.mxu0 0.0
    %188 = vmatmul.mubr.f32.gmra.mxu0 %v94
    %v189 = vpop.f32.mrf.mxu0
    %v190 = vadd.f32 %v116, %v189
    %v191 = vpop.f32.mrf.mxu0
    %192 = vdwg.mxu0
    %v193 = vmax.f32 %v185, 0.0
    %v194 = vmax.f32 %v190, 0.0
    %v195 = vld [vmem:[%s1] sm:$0xff]
    %v196 = vld [vmem:[%s1 + $0x8] sm:$0xff]
    %v197 = vld [vmem:[%s4] sm:$0xff]
    %v198 = vld [vmem:[%s4 + $0x8] sm:$0xff]
    %v199 = vld [vmem:[%s4 + $0x10] sm:$0xff]
    %v200 = vld [vmem:[%s4 + $0x18] sm:$0xff]
    %v201 = vld [vmem:[%s4 + $0x20] sm:$0xff]
    %v202 = vld [vmem:[%s4 + $0x28] sm:$0xff]
    %v203 = vld [vmem:[%s4 + $0x30] sm:$0xff]
    %v204 = vld [vmem:[%s4 + $0x38] sm:$0xff]
    %v205 = vld [vmem:[%s4 + $0x40] sm:$0xff]
    %v206 = vld [vmem:[%s4 + $0x48] sm:$0xff]
    %v207 = vld [vmem:[%s4 + $0x50] sm:$0xff]
    %v208 = vld [vmem:[%s4 + $0x58] sm:$0xff]
    %v209 = vld [vmem:[%s4 + $0x60] sm:$0xff]
    %v210 = vld [vmem:[%s4 + $0x68] sm:$0xff]
    %v211 = vld [vmem:[%s4 + $0x70] sm:$0xff]
    %v212 = vld [vmem:[%s4 + $0x78] sm:$0xff]
    %v213 = vld [vmem:[%s5] sm:$0x1]
    %v215 = vlaneseq
    %v216 = vshrl.u32 %v215, 7
    %v217 = vsub.s32 0, %v216
    %v218 = vrot.slane %v213, %v217
    %220 = vmatprep.subr.mxu0 0.0
    %221 = vmatpush1.msra.mxu0 %v212
    %222 = vmatprep.subr.mxu0 0.0
    %223 = vmatpush1.msra.mxu0 %v211
    %224 = vmatprep.subr.mxu0 0.0
    %225 = vmatpush1.msra.mxu0 %v210
    %226 = vmatprep.subr.mxu0 0.0
    %227 = vmatpush1.msra.mxu0 %v209
    %228 = vmatprep.subr.mxu0 0.0
    %229 = vmatpush1.msra.mxu0 %v208
    %230 = vmatprep.subr.mxu0 0.0
    %231 = vmatpush1.msra.mxu0 %v207
    %232 = vmatprep.subr.mxu0 0.0
    %233 = vmatpush1.msra.mxu0 %v206
    %234 = vmatprep.subr.mxu0 0.0
    %235 = vmatpush1.msra.mxu0 %v205
    %236 = vmatprep.subr.mxu0 0.0
    %237 = vmatpush1.msra.mxu0 %v204
    %238 = vmatprep.subr.mxu0 0.0
    %239 = vmatpush1.msra.mxu0 %v203
    %240 = vmatprep.subr.mxu0 0.0
    %241 = vmatpush1.msra.mxu0 %v202
    %242 = vmatprep.subr.mxu0 0.0
    %243 = vmatpush1.msra.mxu0 %v201
    %244 = vmatprep.subr.mxu0 0.0
    %245 = vmatpush1.msra.mxu0 %v200
    %246 = vmatprep.subr.mxu0 0.0
    %247 = vmatpush1.msra.mxu0 %v199
    %248 = vmatprep.subr.mxu0 0.0
    %249 = vmatpush1.msra.mxu0 %v198
    %250 = vmatprep.subr.mxu0 0.0
    %251 = vmatpush1.msra.mxu0 %v197
    %252 = vmatprep.subr.mxu0 0.0
    %253 = vmatpush2.msra.mxu0 0.0
    %254 = vmatprep.subr.mxu0 0.0
    %255 = vmatpush2.msra.mxu0 0.0
    %256 = vmatprep.subr.mxu0 0.0
    %257 = vmatpush2.msra.mxu0 0.0
    %258 = vmatprep.subr.mxu0 0.0
    %259 = vmatpush2.msra.mxu0 0.0
    %260 = vmatprep.subr.mxu0 0.0
    %261 = vmatpush2.msra.mxu0 0.0
    %262 = vmatprep.subr.mxu0 0.0
    %263 = vmatpush2.msra.mxu0 0.0
    %264 = vmatprep.subr.mxu0 0.0
    %265 = vmatpush2.msra.mxu0 0.0
    %266 = vmatprep.subr.mxu0 0.0
    %267 = vmatpush2.msra.mxu0 0.0
    %268 = vmatprep.subr.mxu0 0.0
    %269 = vmatpush2.msra.mxu0 0.0
    %270 = vmatprep.subr.mxu0 0.0
    %271 = vmatpush2.msra.mxu0 0.0
    %272 = vmatprep.subr.mxu0 0.0
    %273 = vmatpush2.msra.mxu0 0.0
    %274 = vmatprep.subr.mxu0 0.0
    %275 = vmatpush2.msra.mxu0 0.0
    %276 = vmatprep.subr.mxu0 0.0
    %277 = vmatpush2.msra.mxu0 0.0
    %278 = vmatprep.subr.mxu0 0.0
    %279 = vmatpush2.msra.mxu0 0.0
    %280 = vmatprep.subr.mxu0 0.0
    %281 = vmatpush2.msra.mxu0 0.0
    %282 = vmatprep.subr.mxu0 0.0
    %283 = vmatpush2.msra.mxu0 0.0
    %284 = vmatprep.mubr.f32.mxu0 0.0
    %285 = vmatmul.mubr.f32.gmra.mxu0 %v195
    %v286 = vpop.f32.mrf.mxu0
    %v287 = vadd.f32 %v218, %v286
    %v288 = vpop.f32.mrf.mxu0
    %289 = vmatprep.mubr.f32.mxu0 0.0
    %290 = vmatmul.mubr.f32.gmra.mxu0 %v196
    %v291 = vpop.f32.mrf.mxu0
    %v292 = vadd.f32 %v218, %v291
    %v293 = vpop.f32.mrf.mxu0
    %294 = vdwg.mxu0
    %v295 = vmax.f32 %v287, 0.0
    %v296 = vmax.f32 %v292, 0.0
    %v297 = vld [vmem:[#allocation4] sm:$0xff]
    %v298 = vld [vmem:[#allocation4 + $0x8] sm:$0xff]
    %v299 = vld [vmem:[#allocation4 + $0x10] sm:$0xff]
    %v300 = vld [vmem:[#allocation4 + $0x18] sm:$0xff]
    %v301 = vld [vmem:[#allocation4 + $0x20] sm:$0xff]
    %v302 = vld [vmem:[#allocation4 + $0x28] sm:$0xff]
    %v303 = vld [vmem:[#allocation4 + $0x30] sm:$0xff]
    %v304 = vld [vmem:[#allocation4 + $0x38] sm:$0xff]
    %v305 = vld [vmem:[#allocation4 + $0x40] sm:$0xff]
    %v306 = vld [vmem:[#allocation4 + $0x48] sm:$0xff]
    %v307 = vld [vmem:[#allocation4 + $0x50] sm:$0xff]
    %v308 = vld [vmem:[#allocation4 + $0x58] sm:$0xff]
    %v309 = vld [vmem:[#allocation4 + $0x60] sm:$0xff]
    %v310 = vld [vmem:[#allocation4 + $0x68] sm:$0xff]
    %v311 = vld [vmem:[#allocation4 + $0x70] sm:$0xff]
    %v312 = vld [vmem:[#allocation4 + $0x78] sm:$0xff]
    %v313 = vld [vmem:[%s7] sm:$0x1]
    %v315 = vlaneseq
    %v316 = vshrl.u32 %v315, 7
    %v317 = vsub.s32 0, %v316
    %v318 = vrot.slane %v313, %v317
    %320 = vmatprep.subr.mxu0 0.0
    %321 = vmatpush1.msra.mxu0 %v312
    %322 = vmatprep.subr.mxu0 0.0
    %323 = vmatpush1.msra.mxu0 %v311
    %324 = vmatprep.subr.mxu0 0.0
    %325 = vmatpush1.msra.mxu0 %v310
    %326 = vmatprep.subr.mxu0 0.0
    %327 = vmatpush1.msra.mxu0 %v309
    %328 = vmatprep.subr.mxu0 0.0
    %329 = vmatpush1.msra.mxu0 %v308
    %330 = vmatprep.subr.mxu0 0.0
    %331 = vmatpush1.msra.mxu0 %v307
    %332 = vmatprep.subr.mxu0 0.0
    %333 = vmatpush1.msra.mxu0 %v306
    %334 = vmatprep.subr.mxu0 0.0
    %335 = vmatpush1.msra.mxu0 %v305
    %336 = vmatprep.subr.mxu0 0.0
    %337 = vmatpush1.msra.mxu0 %v304
    %338 = vmatprep.subr.mxu0 0.0
    %339 = vmatpush1.msra.mxu0 %v303
    %340 = vmatprep.subr.mxu0 0.0
    %341 = vmatpush1.msra.mxu0 %v302
    %342 = vmatprep.subr.mxu0 0.0
    %343 = vmatpush1.msra.mxu0 %v301
    %344 = vmatprep.subr.mxu0 0.0
    %345 = vmatpush1.msra.mxu0 %v300
    %346 = vmatprep.subr.mxu0 0.0
    %347 = vmatpush1.msra.mxu0 %v299
    %348 = vmatprep.subr.mxu0 0.0
    %349 = vmatpush1.msra.mxu0 %v298
    %350 = vmatprep.subr.mxu0 0.0
    %351 = vmatpush1.msra.mxu0 %v297
    %352 = vmatprep.subr.mxu0 0.0
    %353 = vmatpush2.msra.mxu0 0.0
    %354 = vmatprep.subr.mxu0 0.0
    %355 = vmatpush2.msra.mxu0 0.0
    %356 = vmatprep.subr.mxu0 0.0
    %357 = vmatpush2.msra.mxu0 0.0
    %358 = vmatprep.subr.mxu0 0.0
    %359 = vmatpush2.msra.mxu0 0.0
    %360 = vmatprep.subr.mxu0 0.0
    %361 = vmatpush2.msra.mxu0 0.0
    %362 = vmatprep.subr.mxu0 0.0
    %363 = vmatpush2.msra.mxu0 0.0
    %364 = vmatprep.subr.mxu0 0.0
    %365 = vmatpush2.msra.mxu0 0.0
    %366 = vmatprep.subr.mxu0 0.0
    %367 = vmatpush2.msra.mxu0 0.0
    %368 = vmatprep.subr.mxu0 0.0
    %369 = vmatpush2.msra.mxu0 0.0
    %370 = vmatprep.subr.mxu0 0.0
    %371 = vmatpush2.msra.mxu0 0.0
    %372 = vmatprep.subr.mxu0 0.0
    %373 = vmatpush2.msra.mxu0 0.0
    %374 = vmatprep.subr.mxu0 0.0
    %375 = vmatpush2.msra.mxu0 0.0
    %376 = vmatprep.subr.mxu0 0.0
    %377 = vmatpush2.msra.mxu0 0.0
    %378 = vmatprep.subr.mxu0 0.0
    %379 = vmatpush2.msra.mxu0 0.0
    %380 = vmatprep.subr.mxu0 0.0
    %381 = vmatpush2.msra.mxu0 0.0
    %382 = vmatprep.subr.mxu0 0.0
    %383 = vmatpush2.msra.mxu0 0.0
    %384 = vmatprep.mubr.f32.mxu0 0.0
    %385 = vmatmul.mubr.f32.gmra.mxu0 %v295
    %v386 = vpop.f32.mrf.mxu0
    %v387 = vadd.f32 %v318, %v386
    %v388 = vpop.f32.mrf.mxu0
    %389 = vmatprep.mubr.f32.mxu0 0.0
    %390 = vmatmul.mubr.f32.gmra.mxu0 %v296
    %v391 = vpop.f32.mrf.mxu0
    %v392 = vadd.f32 %v318, %v391
    %v393 = vpop.f32.mrf.mxu0
    %394 = vdwg.mxu0
    %v395 = vmax.f32 %v387, 0.0
    %v396 = vmax.f32 %v392, 0.0
    %v397 = vld [vmem:[#allocation6] sm:$0xff]
    %v398 = vld [vmem:[#allocation6 + $0x8] sm:$0xff]
    %v399 = vld [vmem:[#allocation6 + $0x10] sm:$0xff]
    %v400 = vld [vmem:[#allocation6 + $0x18] sm:$0xff]
    %v401 = vld [vmem:[#allocation6 + $0x20] sm:$0xff]
    %v402 = vld [vmem:[#allocation6 + $0x28] sm:$0xff]
    %v403 = vld [vmem:[#allocation6 + $0x30] sm:$0xff]
    %v404 = vld [vmem:[#allocation6 + $0x38] sm:$0xff]
    %v405 = vld [vmem:[#allocation6 + $0x40] sm:$0xff]
    %v406 = vld [vmem:[#allocation6 + $0x48] sm:$0xff]
    %v407 = vld [vmem:[#allocation6 + $0x50] sm:$0xff]
    %v408 = vld [vmem:[#allocation6 + $0x58] sm:$0xff]
    %v409 = vld [vmem:[#allocation6 + $0x60] sm:$0xff]
    %v410 = vld [vmem:[#allocation6 + $0x68] sm:$0xff]
    %v411 = vld [vmem:[#allocation6 + $0x70] sm:$0xff]
    %v412 = vld [vmem:[#allocation6 + $0x78] sm:$0xff]
    %v413 = vld [vmem:[#allocation7] sm:$0xff]
    %v414 = vld [vmem:[#allocation7 + $0x8] sm:$0xff]
    %v415 = vld [vmem:[#allocation7 + $0x10] sm:$0xff]
    %v416 = vld [vmem:[#allocation7 + $0x18] sm:$0xff]
    %v417 = vld [vmem:[#allocation7 + $0x20] sm:$0xff]
    %v418 = vld [vmem:[#allocation7 + $0x28] sm:$0xff]
    %v419 = vld [vmem:[#allocation7 + $0x30] sm:$0xff]
    %v420 = vld [vmem:[#allocation7 + $0x38] sm:$0xff]
    %v421 = vld [vmem:[#allocation7 + $0x40] sm:$0xff]
    %v422 = vld [vmem:[#allocation7 + $0x48] sm:$0xff]
    %v423 = vld [vmem:[#allocation7 + $0x50] sm:$0xff]
    %v424 = vld [vmem:[#allocation7 + $0x58] sm:$0xff]
    %v425 = vld [vmem:[#allocation7 + $0x60] sm:$0xff]
    %v426 = vld [vmem:[#allocation7 + $0x68] sm:$0xff]
    %v427 = vld [vmem:[#allocation7 + $0x70] sm:$0xff]
    %v428 = vld [vmem:[#allocation7 + $0x78] sm:$0xff]
    %429 = vmatprep.subr.mxu0 0.0
    %430 = vmatpush1.msra.mxu0 %v428
    %431 = vmatprep.subr.mxu0 0.0
    %432 = vmatpush1.msra.mxu0 %v427
    %433 = vmatprep.subr.mxu0 0.0
    %434 = vmatpush1.msra.mxu0 %v426
    %435 = vmatprep.subr.mxu0 0.0
    %436 = vmatpush1.msra.mxu0 %v425
    %437 = vmatprep.subr.mxu0 0.0
    %438 = vmatpush1.msra.mxu0 %v424
    %439 = vmatprep.subr.mxu0 0.0
    %440 = vmatpush1.msra.mxu0 %v423
    %441 = vmatprep.subr.mxu0 0.0
    %442 = vmatpush1.msra.mxu0 %v422
    %443 = vmatprep.subr.mxu0 0.0
    %444 = vmatpush1.msra.mxu0 %v421
    %445 = vmatprep.subr.mxu0 0.0
    %446 = vmatpush1.msra.mxu0 %v420
    %447 = vmatprep.subr.mxu0 0.0
    %448 = vmatpush1.msra.mxu0 %v419
    %449 = vmatprep.subr.mxu0 0.0
    %450 = vmatpush1.msra.mxu0 %v418
    %451 = vmatprep.subr.mxu0 0.0
    %452 = vmatpush1.msra.mxu0 %v417
    %453 = vmatprep.subr.mxu0 0.0
    %454 = vmatpush1.msra.mxu0 %v416
    %455 = vmatprep.subr.mxu0 0.0
    %456 = vmatpush1.msra.mxu0 %v415
    %457 = vmatprep.subr.mxu0 0.0
    %458 = vmatpush1.msra.mxu0 %v414
    %459 = vmatprep.subr.mxu0 0.0
    %460 = vmatpush1.msra.mxu0 %v413
    %461 = vmatprep.subr.mxu0 0.0
    %462 = vmatpush2.msra.mxu0 0.0
    %463 = vmatprep.subr.mxu0 0.0
    %464 = vmatpush2.msra.mxu0 0.0
    %465 = vmatprep.subr.mxu0 0.0
    %466 = vmatpush2.msra.mxu0 0.0
    %467 = vmatprep.subr.mxu0 0.0
    %468 = vmatpush2.msra.mxu0 0.0
    %469 = vmatprep.subr.mxu0 0.0
    %470 = vmatpush2.msra.mxu0 0.0
    %471 = vmatprep.subr.mxu0 0.0
    %472 = vmatpush2.msra.mxu0 0.0
    %473 = vmatprep.subr.mxu0 0.0
    %474 = vmatpush2.msra.mxu0 0.0
    %475 = vmatprep.subr.mxu0 0.0
    %476 = vmatpush2.msra.mxu0 0.0
    %477 = vmatprep.subr.mxu0 0.0
    %478 = vmatpush2.msra.mxu0 0.0
    %479 = vmatprep.subr.mxu0 0.0
    %480 = vmatpush2.msra.mxu0 0.0
    %481 = vmatprep.subr.mxu0 0.0
    %482 = vmatpush2.msra.mxu0 0.0
    %483 = vmatprep.subr.mxu0 0.0
    %484 = vmatpush2.msra.mxu0 0.0
    %485 = vmatprep.subr.mxu0 0.0
    %486 = vmatpush2.msra.mxu0 0.0
    %487 = vmatprep.subr.mxu0 0.0
    %488 = vmatpush2.msra.mxu0 0.0
    %489 = vmatprep.subr.mxu0 0.0
    %490 = vmatpush2.msra.mxu0 0.0
    %491 = vmatprep.subr.mxu0 0.0
    %492 = vmatpush2.msra.mxu0 0.0
    %493 = vmatprep.mubr.f32.mxu0 0.0
    %494 = vmatmul.mubr.f32.gmra.mxu0 %v395
    %v495 = vpop.f32.mrf.mxu0
    %v496 = vadd.f32 0.0, %v495
    %v497 = vpop.f32.mrf.mxu0
    %498 = vmatprep.mubr.f32.mxu0 0.0
    %499 = vmatmul.mubr.f32.gmra.mxu0 %v396
    %v500 = vpop.f32.mrf.mxu0
    %v501 = vadd.f32 0.0, %v500
    %v502 = vpop.f32.mrf.mxu0
    %503 = vdwg.mxu0
    %504 = vmatprep.subr.mxu0 0.0
    %505 = vmatpush1.msra.mxu0 %v412
    %506 = vmatprep.subr.mxu0 0.0
    %507 = vmatpush1.msra.mxu0 %v411
    %508 = vmatprep.subr.mxu0 0.0
    %509 = vmatpush1.msra.mxu0 %v410
    %510 = vmatprep.subr.mxu0 0.0
    %511 = vmatpush1.msra.mxu0 %v409
    %512 = vmatprep.subr.mxu0 0.0
    %513 = vmatpush1.msra.mxu0 %v408
    %514 = vmatprep.subr.mxu0 0.0
    %515 = vmatpush1.msra.mxu0 %v407
    %516 = vmatprep.subr.mxu0 0.0
    %517 = vmatpush1.msra.mxu0 %v406
    %518 = vmatprep.subr.mxu0 0.0
    %519 = vmatpush1.msra.mxu0 %v405
    %520 = vmatprep.subr.mxu0 0.0
    %521 = vmatpush1.msra.mxu0 %v404
    %522 = vmatprep.subr.mxu0 0.0
    %523 = vmatpush1.msra.mxu0 %v403
    %524 = vmatprep.subr.mxu0 0.0
    %525 = vmatpush1.msra.mxu0 %v402
    %526 = vmatprep.subr.mxu0 0.0
    %527 = vmatpush1.msra.mxu0 %v401
    %528 = vmatprep.subr.mxu0 0.0
    %529 = vmatpush1.msra.mxu0 %v400
    %530 = vmatprep.subr.mxu0 0.0
    %531 = vmatpush1.msra.mxu0 %v399
    %532 = vmatprep.subr.mxu0 0.0
    %533 = vmatpush1.msra.mxu0 %v398
    %534 = vmatprep.subr.mxu0 0.0
    %535 = vmatpush1.msra.mxu0 %v397
    %536 = vmatprep.subr.mxu0 0.0
    %537 = vmatpush2.msra.mxu0 0.0
    %538 = vmatprep.subr.mxu0 0.0
    %539 = vmatpush2.msra.mxu0 0.0
    %540 = vmatprep.subr.mxu0 0.0
    %541 = vmatpush2.msra.mxu0 0.0
    %542 = vmatprep.subr.mxu0 0.0
    %543 = vmatpush2.msra.mxu0 0.0
    %544 = vmatprep.subr.mxu0 0.0
    %545 = vmatpush2.msra.mxu0 0.0
    %546 = vmatprep.subr.mxu0 0.0
    %547 = vmatpush2.msra.mxu0 0.0
    %548 = vmatprep.subr.mxu0 0.0
    %549 = vmatpush2.msra.mxu0 0.0
    %550 = vmatprep.subr.mxu0 0.0
    %551 = vmatpush2.msra.mxu0 0.0
    %552 = vmatprep.subr.mxu0 0.0
    %553 = vmatpush2.msra.mxu0 0.0
    %554 = vmatprep.subr.mxu0 0.0
    %555 = vmatpush2.msra.mxu0 0.0
    %556 = vmatprep.subr.mxu0 0.0
    %557 = vmatpush2.msra.mxu0 0.0
    %558 = vmatprep.subr.mxu0 0.0
    %559 = vmatpush2.msra.mxu0 0.0
    %560 = vmatprep.subr.mxu0 0.0
    %561 = vmatpush2.msra.mxu0 0.0
    %562 = vmatprep.subr.mxu0 0.0
    %563 = vmatpush2.msra.mxu0 0.0
    %564 = vmatprep.subr.mxu0 0.0
    %565 = vmatpush2.msra.mxu0 0.0
    %566 = vmatprep.subr.mxu0 0.0
    %567 = vmatpush2.msra.mxu0 0.0
    %568 = vmatprep.mubr.f32.mxu0 0.0
    %569 = vmatmul.mubr.f32.gmra.mxu0 %v193
    %v570 = vpop.f32.mrf.mxu0
    %v571 = vadd.f32 %v496, %v570
    %v572 = vpop.f32.mrf.mxu0
    %573 = vmatprep.mubr.f32.mxu0 0.0
    %574 = vmatmul.mubr.f32.gmra.mxu0 %v194
    %v575 = vpop.f32.mrf.mxu0
    %v576 = vadd.f32 %v501, %v575
    %v577 = vpop.f32.mrf.mxu0
    %578 = vdwg.mxu0
    %v579 = vld [vmem:[%s10] sm:$0x1]
    %v581 = vlaneseq
    %v582 = vshrl.u32 %v581, 7
    %v583 = vsub.s32 0, %v582
    %v584 = vrot.slane %v579, %v583
    %v586 = vadd.f32 %v571, %v584
    %v587 = vadd.f32 %v576, %v584
    %588 = vst [vmem:[%s11] sm:$0xff] %v586
    %589 = vst [vmem:[%s11 + $0x8] sm:$0xff] %v587
    // Predicated region
    $region62: #{_lambda_.1} parent=1 // pred_check
      _
    $region63: #{_lambda_.1} parent=1 // pred_check_branch
      %591 = sbr.rel (0) target = $region65
    $region64: #{_lambda_.1} parent=1 // pred_region
      _
    $region65: #{_lambda_.1} parent=1 // pred_fallthru
      _
    // Predicated region
    $region66: #{_lambda_.1} parent=1 // pred_check
      _
    $region67: #{_lambda_.1} parent=1 // pred_check_branch
      %593 = sbr.rel (0) target = $region69
    $region68: #{_lambda_.1} parent=1 // pred_region
      _
    $region69: #{_lambda_.1} parent=1 // pred_fallthru
      _
    %594 = vsyncpa [#allocation3], 1
    %595 = vsyncpa [#allocation5], 1
    %596 = vsyncpa [#allocation8], 1

</llo_original>
